<compile_context>
chip_gen: v7x
topology: tpu7x:2x2x1
jax: 0.10.0
libtpu: 0.0.40
codegen_flags: <defaults>
</compile_context>

<pallas_src>
import functools

import jax
import jax.numpy as jnp
from jax import lax
from jax.experimental import pallas as pl
from jax.experimental.pallas import tpu as pltpu

NUM_CODES = 64  # the module hard-codes num_codes = 64 inside __init__


def encoding_kernel(x_ref, cw_ref, scale_ref, c2_ref, out_ref,
                    awx_acc, awsum_acc, *, bb, nt, n_true, n_padded,
                    matmul_dtype):
    # x_ref:     (bb, C, nt)  batch block of channel-major features, N on lanes
    # cw_ref:    (K, C)       codewords
    # scale_ref: (K, 1)       smoothing factors
    # c2_ref:    (K, 1)       precomputed sum_c cw^2 (hoisted out of the kernel)
    # out_ref:   (bb, K, C)   encoded features
    # awx_acc:   (bb, K, C)   f32 accumulator for aw @ x^T      (across N tiles)
    # awsum_acc: (bb, K, 1)   f32 accumulator for sum_n aw      (across N tiles)
    nj = pl.program_id(1)

    @pl.when(nj == 0)
    def _init():
        awx_acc[...] = jnp.zeros_like(awx_acc)
        awsum_acc[...] = jnp.zeros_like(awsum_acc)

    cw = cw_ref[...].astype(jnp.float32)            # (K, C)
    cw_mm = cw.astype(matmul_dtype)
    scale = scale_ref[...].astype(jnp.float32)      # (K, 1)
    c2 = c2_ref[...].astype(jnp.float32)            # (K, 1)

    needs_mask = n_padded != n_true                 # static Python bool
    if needs_mask:
        pos = nj * nt + lax.broadcasted_iota(jnp.int32, (1, nt), 1)
        valid = pos < n_true                        # (1, nt)

    for bi in range(bb):                            # bb is small and static
        x = x_ref[bi].astype(jnp.float32)           # (C, nt), N on lanes
        x_mm = x.astype(matmul_dtype)

        # --- scaled L2 distances via matmul expansion (MXU) ---
        x2 = jnp.sum(x * x, axis=0, keepdims=True)                 # (1, nt)
        xc = lax.dot_general(cw_mm, x_mm, (((1,), (0,)), ((), ())),
                             preferred_element_type=jnp.float32)   # (K, nt)
        scaled_l2 = scale * (x2 + c2 - 2.0 * xc)                   # (K, nt)

        # --- softmax over codewords (axis K = sublanes) ---
        m = jnp.max(scaled_l2, axis=0, keepdims=True)              # (1, nt)
        e = jnp.exp(scaled_l2 - m)
        denom = jnp.sum(e, axis=0, keepdims=True)                  # (1, nt)
        inv = pl.reciprocal(denom, approx=True)                    # EUP
        inv = inv * (2.0 - denom * inv)    # one Newton step on (1, nt) only
        aw = e * inv                                               # (K, nt)
        if needs_mask:
            aw = jnp.where(valid, aw, 0.0)

        # --- aggregate partials: aw @ x^T (MXU) and sum_n aw (XLU) ---
        awx = lax.dot_general(aw.astype(matmul_dtype), x_mm,
                              (((1,), (1,)), ((), ())),
                              preferred_element_type=jnp.float32)  # (K, C)
        aw_sum = jnp.sum(aw, axis=1, keepdims=True)                # (K, 1)

        awx_acc[bi] = awx_acc[bi] + awx
        awsum_acc[bi] = awsum_acc[bi] + aw_sum

    @pl.when(nj == pl.num_programs(1) - 1)
    def _finalize():
        for bi in range(bb):
            out_ref[bi] = (awx_acc[bi] - cw * awsum_acc[bi]).astype(out_ref.dtype)


def encoding_forward(x_nchw, codewords, scale, *,
                     matmul_dtype=jnp.bfloat16, n_tile=2048):
    """x_nchw: (B, C, W, H) float32. Returns (B, K, C) float32."""
    b, c, w, h = x_nchw.shape
    k = codewords.shape[0]
    n = w * h

    # NCHW -> (B, C, N): pure reshape, no transpose; N lands on the lane axis.
    x_bcn = x_nchw.reshape(b, c, n)

    # Spatial tiling: stream N through the accumulators; pad up to a tile
    # multiple only when tiling is actually needed (mask handles the tail).
    nt = n if n <= n_tile else n_tile
    n_padded = ((n + nt - 1) // nt) * nt
    if n_padded != n:
        x_bcn = jnp.pad(x_bcn, ((0, 0), (0, 0), (0, n_padded - n)))

    # Batch blocking: aim for ~2 grid steps along the batch axis (feeds both
    # v7x TensorCores, amortises per-step overhead on single-TC v5e/v6e),
    # capped so one x block stays comfortably inside VMEM.
    bb = 1
    x_block_budget = 4 * 1024 * 1024
    for cand in range(max(b // 2, 1), 0, -1):
        if b % cand == 0 and cand * c * nt * x_bcn.dtype.itemsize <= x_block_budget:
            bb = cand
            break

    codewords_f32 = codewords.astype(jnp.float32)
    scale_2d = scale.reshape(k, 1).astype(jnp.float32)
    c2 = jnp.sum(jnp.square(codewords_f32), axis=1, keepdims=True)  # (K, 1)

    kernel = functools.partial(
        encoding_kernel, bb=bb, nt=nt, n_true=n, n_padded=n_padded,
        matmul_dtype=matmul_dtype)

    out = pl.pallas_call(
        kernel,
        out_shape=jax.ShapeDtypeStruct((b, k, c), jnp.float32),
        grid_spec=pltpu.PrefetchScalarGridSpec(
            num_scalar_prefetch=0,
            grid=(b // bb, n_padded // nt),
            in_specs=[
                pl.BlockSpec((bb, c, nt), lambda i, j: (i, 0, j)),  # x
                pl.BlockSpec((k, c), lambda i, j: (0, 0)),          # codewords
                pl.BlockSpec((k, 1), lambda i, j: (0, 0)),          # scale
                pl.BlockSpec((k, 1), lambda i, j: (0, 0)),          # sum_c cw^2
            ],
            out_specs=pl.BlockSpec((bb, k, c), lambda i, j: (i, 0, 0)),
            scratch_shapes=[
                pltpu.VMEM((bb, k, c), jnp.float32),   # awx accumulator
                pltpu.VMEM((bb, k, 1), jnp.float32),   # aw_sum accumulator
            ]),
        compiler_params=pltpu.CompilerParams(
            dimension_semantics=("parallel", "arbitrary"),
            vmem_limit_bytes=64 * 1024 * 1024),
    )(x_bcn, codewords_f32, scale_2d, c2)
    return out


def encoding_reference(x_nchw, codewords, scale):
    """Pure-JAX reference mirroring the PyTorch code (broadcasted form)."""
    b, c, w, h = x_nchw.shape
    x = jnp.transpose(x_nchw.reshape(b, c, w * h), (0, 2, 1))      # (B, N, C)
    diff = x[:, :, None, :] - codewords[None, None, :, :]          # (B, N, K, C)
    scaled_l2 = scale[None, None, :] * jnp.sum(diff * diff, axis=3)
    aw = jax.nn.softmax(scaled_l2, axis=2)                         # (B, N, K)
    return jnp.sum(aw[..., None] * diff, axis=1)                   # (B, K, C)


if __name__ == "__main__":
    # Small, module-consistent shapes: batch=2, in_channels=32, spatial 16x16.
    B, C, W, H = 2, 32, 16, 16
    in_channels = C

    key = jax.random.PRNGKey(0)
    kx, kc, ks = jax.random.split(key, 3)

    # Deterministic parameter init matching the module's __init__:
    std = 1.0 / (NUM_CODES * in_channels) ** 0.5
    codewords = jax.random.uniform(kc, (NUM_CODES, in_channels),
                                   minval=-std, maxval=std, dtype=jnp.float32)
    scale = jax.random.uniform(ks, (NUM_CODES,),
                               minval=-1.0, maxval=0.0, dtype=jnp.float32)
    x = jax.random.normal(kx, (B, C, W, H), dtype=jnp.float32)

    ref = encoding_reference(x, codewords, scale)
    ref_norm = float(jnp.max(jnp.abs(ref)))

    # Recommended config: bf16 MXU inputs, f32 accumulation / softmax.
    out_bf16 = jax.block_until_ready(
        encoding_forward(x, codewords, scale, matmul_dtype=jnp.bfloat16))
    assert out_bf16.shape == (B, NUM_CODES, C), out_bf16.shape
    err_bf16 = float(jnp.max(jnp.abs(out_bf16 - ref))) / ref_norm
    assert err_bf16 < 1e-2, err_bf16

    # Full-f32 matmul path: tight check of the algebra.
    out_f32 = jax.block_until_ready(
        encoding_forward(x, codewords, scale, matmul_dtype=jnp.float32))
    err_f32 = float(jnp.max(jnp.abs(out_f32 - ref))) / ref_norm
    assert err_f32 < 1e-3, err_f32

    print("KERNEL_OK")
</pallas_src>

<mosaic_0001>
module attributes {stable_mosaic.version = 11 : i64} {
  func.func @encoding_kernel(%arg0: i32, %arg1: i32, %arg2: memref<1x32x256xf32, #tpu.memory_space<vmem>>, %arg3: memref<64x32xf32, #tpu.memory_space<vmem>>, %arg4: memref<64x1xf32, #tpu.memory_space<vmem>>, %arg5: memref<64x1xf32, #tpu.memory_space<vmem>>, %arg6: memref<1x64x32xf32, #tpu.memory_space<vmem>>, %arg7: memref<1x64x32xf32, #tpu.memory_space<vmem>>, %arg8: memref<1x64x1xf32, #tpu.memory_space<vmem>>) attributes {dimension_semantics = [#tpu.dimension_semantics<parallel>, #tpu.dimension_semantics<arbitrary>], iteration_bounds = array<i64: 2, 1>, scalar_prefetch = 0 : i64, scratch_operands = 2 : i64, tpu.core_type = #tpu.core_type<tc>, window_params = [{transform_indices = @transform_0, window_bounds = array<i64: 1, 32, 256>}, {pipeline_mode = #tpu.pipeline_mode<synchronous>, transform_indices = @transform_1, window_bounds = array<i64: 64, 32>}, {pipeline_mode = #tpu.pipeline_mode<synchronous>, transform_indices = @transform_2, window_bounds = array<i64: 64, 1>}, {pipeline_mode = #tpu.pipeline_mode<synchronous>, transform_indices = @transform_3, window_bounds = array<i64: 64, 1>}, {transform_indices = @transform_4, window_bounds = array<i64: 1, 64, 32>}]} {
    %c0_i32 = arith.constant 0 : i32
    %0 = arith.cmpi eq, %arg1, %c0_i32 : i32
    %1 = arith.extui %0 : i1 to i32
    %c0_i32_0 = arith.constant 0 : i32
    %2 = arith.cmpi ne, %1, %c0_i32_0 : i32
    scf.if %2 {
      %cst_30 = arith.constant 0.000000e+00 : f32
      %55 = vector.broadcast %cst_30 : f32 to vector<1x64x32xf32>
      %c0_31 = arith.constant 0 : index
      %c0_32 = arith.constant 0 : index
      %c0_33 = arith.constant 0 : index
      %56 = vector.load %arg7[%c0_31, %c0_32, %c0_33] : memref<1x64x32xf32, #tpu.memory_space<vmem>>, vector<1x64x32xf32>
      tpu.vector_store %arg7[%c0_31, %c0_32, %c0_33], %55 {strides = array<i32>} : memref<1x64x32xf32, #tpu.memory_space<vmem>>, vector<1x64x32xf32>,
      %cst_34 = arith.constant 0.000000e+00 : f32
      %57 = vector.broadcast %cst_34 : f32 to vector<1x64x1xf32>
      %c0_35 = arith.constant 0 : index
      %c0_36 = arith.constant 0 : index
      %c0_37 = arith.constant 0 : index
      %58 = vector.load %arg8[%c0_35, %c0_36, %c0_37] : memref<1x64x1xf32, #tpu.memory_space<vmem>>, vector<1x64x1xf32>
      tpu.vector_store %arg8[%c0_35, %c0_36, %c0_37], %57 {strides = array<i32>} : memref<1x64x1xf32, #tpu.memory_space<vmem>>, vector<1x64x1xf32>,
    } else {
    }
    %c0 = arith.constant 0 : index
    %c0_1 = arith.constant 0 : index
    %3 = vector.load %arg3[%c0, %c0_1] : memref<64x32xf32, #tpu.memory_space<vmem>>, vector<64x32xf32>
    %4 = arith.truncf %3 : vector<64x32xf32> to vector<64x32xbf16>
    %c0_2 = arith.constant 0 : index
    %c0_3 = arith.constant 0 : index
    %5 = vector.load %arg4[%c0_2, %c0_3] : memref<64x1xf32, #tpu.memory_space<vmem>>, vector<64x1xf32>
    %c0_4 = arith.constant 0 : index
    %c0_5 = arith.constant 0 : index
    %6 = vector.load %arg5[%c0_4, %c0_5] : memref<64x1xf32, #tpu.memory_space<vmem>>, vector<64x1xf32>
    %c0_6 = arith.constant 0 : index
    %c0_7 = arith.constant 0 : index
    %c0_8 = arith.constant 0 : index
    %7 = vector.load %arg2[%c0_6, %c0_7, %c0_8] : memref<1x32x256xf32, #tpu.memory_space<vmem>>, vector<1x32x256xf32>
    %8 = vector.shape_cast %7 : vector<1x32x256xf32> to vector<32x256xf32>
    %9 = arith.truncf %8 : vector<32x256xf32> to vector<32x256xbf16>
    %10 = arith.mulf %8, %8 : vector<32x256xf32>
    %cst = arith.constant dense<0.000000e+00> : vector<256xf32>
    %11 = vector.multi_reduction <add>, %10, %cst [0] : vector<32x256xf32> to vector<256xf32>
    %12 = vector.shape_cast %11 : vector<256xf32> to vector<1x256xf32>
    %cst_9 = arith.constant dense<0.000000e+00> : vector<64x256xf32>
    %13 = tpu.matmul %4, %9, %cst_9 {dimension_numbers = #tpu.dot_dimension_numbers<[1], [0], [0], [1], [0, 0, 1, 1], [], []>} : vector<64x32xbf16>, vector<32x256xbf16>, vector<64x256xf32> -> vector<64x256xf32>
    %14 = vector.broadcast %12 : vector<1x256xf32> to vector<64x256xf32>
    %15 = vector.broadcast %6 : vector<64x1xf32> to vector<64x256xf32>
    %16 = arith.addf %14, %15 : vector<64x256xf32>
    %cst_10 = arith.constant 2.000000e+00 : f32
    %17 = vector.broadcast %cst_10 : f32 to vector<64x256xf32>
    %18 = arith.mulf %17, %13 : vector<64x256xf32>
    %19 = arith.subf %16, %18 : vector<64x256xf32>
    %20 = vector.broadcast %5 : vector<64x1xf32> to vector<64x256xf32>
    %21 = arith.mulf %20, %19 : vector<64x256xf32>
    %cst_11 = arith.constant dense<0xFF800000> : vector<256xf32>
    %22 = vector.multi_reduction <maximumf>, %21, %cst_11 [0] : vector<64x256xf32> to vector<256xf32>
    %23 = vector.shape_cast %22 : vector<256xf32> to vector<1x256xf32>
    %24 = vector.broadcast %23 : vector<1x256xf32> to vector<64x256xf32>
    %25 = arith.subf %21, %24 : vector<64x256xf32>
    %26 = math.exp %25 : vector<64x256xf32>
    %cst_12 = arith.constant dense<0.000000e+00> : vector<256xf32>
    %27 = vector.multi_reduction <add>, %26, %cst_12 [0] : vector<64x256xf32> to vector<256xf32>
    %28 = vector.shape_cast %27 : vector<256xf32> to vector<1x256xf32>
    %29 = tpu.reciprocal %28 {approx = true} : vector<1x256xf32> -> vector<1x256xf32>
    %30 = arith.mulf %28, %29 : vector<1x256xf32>
    %cst_13 = arith.constant 2.000000e+00 : f32
    %31 = vector.broadcast %cst_13 : f32 to vector<1x256xf32>
    %32 = arith.subf %31, %30 : vector<1x256xf32>
    %33 = arith.mulf %29, %32 : vector<1x256xf32>
    %34 = vector.broadcast %33 : vector<1x256xf32> to vector<64x256xf32>
    %35 = arith.mulf %26, %34 : vector<64x256xf32>
    %36 = arith.truncf %35 : vector<64x256xf32> to vector<64x256xbf16>
    %cst_14 = arith.constant dense<0.000000e+00> : vector<64x32xf32>
    %37 = tpu.matmul %36, %9, %cst_14 {dimension_numbers = #tpu.dot_dimension_numbers<[1], [1], [0], [0], [0, 0, 1, 0], [], []>} : vector<64x256xbf16>, vector<32x256xbf16>, vector<64x32xf32> -> vector<64x32xf32>
    %cst_15 = arith.constant dense<0.000000e+00> : vector<64xf32>
    %38 = vector.multi_reduction <add>, %35, %cst_15 [1] : vector<64x256xf32> to vector<64xf32>
    %39 = vector.shape_cast %38 : vector<64xf32> to vector<64x1xf32>
    %c0_16 = arith.constant 0 : index
    %c0_17 = arith.constant 0 : index
    %c0_18 = arith.constant 0 : index
    %40 = vector.load %arg7[%c0_16, %c0_17, %c0_18] : memref<1x64x32xf32, #tpu.memory_space<vmem>>, vector<1x64x32xf32>
    %41 = vector.shape_cast %40 : vector<1x64x32xf32> to vector<64x32xf32>
    %42 = arith.addf %41, %37 : vector<64x32xf32>
    %c0_19 = arith.constant 0 : index
    %c0_20 = arith.constant 0 : index
    %c0_21 = arith.constant 0 : index
    %43 = vector.load %arg7[%c0_19, %c0_20, %c0_21] : memref<1x64x32xf32, #tpu.memory_space<vmem>>, vector<1x64x32xf32>
    %44 = vector.shape_cast %43 : vector<1x64x32xf32> to vector<64x32xf32>
    %45 = vector.shape_cast %42 : vector<64x32xf32> to vector<1x64x32xf32>
    tpu.vector_store %arg7[%c0_19, %c0_20, %c0_21], %45 {strides = array<i32>} : memref<1x64x32xf32, #tpu.memory_space<vmem>>, vector<1x64x32xf32>,
    %c0_22 = arith.constant 0 : index
    %c0_23 = arith.constant 0 : index
    %c0_24 = arith.constant 0 : index
    %46 = vector.load %arg8[%c0_22, %c0_23, %c0_24] : memref<1x64x1xf32, #tpu.memory_space<vmem>>, vector<1x64x1xf32>
    %47 = vector.shape_cast %46 : vector<1x64x1xf32> to vector<64x1xf32>
    %48 = arith.addf %47, %39 : vector<64x1xf32>
    %c0_25 = arith.constant 0 : index
    %c0_26 = arith.constant 0 : index
    %c0_27 = arith.constant 0 : index
    %49 = vector.load %arg8[%c0_25, %c0_26, %c0_27] : memref<1x64x1xf32, #tpu.memory_space<vmem>>, vector<1x64x1xf32>
    %50 = vector.shape_cast %49 : vector<1x64x1xf32> to vector<64x1xf32>
    %51 = vector.shape_cast %48 : vector<64x1xf32> to vector<1x64x1xf32>
    tpu.vector_store %arg8[%c0_25, %c0_26, %c0_27], %51 {strides = array<i32>} : memref<1x64x1xf32, #tpu.memory_space<vmem>>, vector<1x64x1xf32>,
    %c0_i32_28 = arith.constant 0 : i32
    %52 = arith.cmpi eq, %arg1, %c0_i32_28 : i32
    %53 = arith.extui %52 : i1 to i32
    %c0_i32_29 = arith.constant 0 : i32
    %54 = arith.cmpi ne, %53, %c0_i32_29 : i32
    scf.if %54 {
      %c0_30 = arith.constant 0 : index
      %c0_31 = arith.constant 0 : index
      %c0_32 = arith.constant 0 : index
      %55 = vector.load %arg7[%c0_30, %c0_31, %c0_32] : memref<1x64x32xf32, #tpu.memory_space<vmem>>, vector<1x64x32xf32>
      %56 = vector.shape_cast %55 : vector<1x64x32xf32> to vector<64x32xf32>
      %c0_33 = arith.constant 0 : index
      %c0_34 = arith.constant 0 : index
      %c0_35 = arith.constant 0 : index
      %57 = vector.load %arg8[%c0_33, %c0_34, %c0_35] : memref<1x64x1xf32, #tpu.memory_space<vmem>>, vector<1x64x1xf32>
      %58 = vector.shape_cast %57 : vector<1x64x1xf32> to vector<64x1xf32>
      %59 = vector.broadcast %58 : vector<64x1xf32> to vector<64x32xf32>
      %60 = arith.mulf %3, %59 : vector<64x32xf32>
      %61 = arith.subf %56, %60 : vector<64x32xf32>
      %c0_36 = arith.constant 0 : index
      %c0_37 = arith.constant 0 : index
      %c0_38 = arith.constant 0 : index
      %62 = vector.load %arg6[%c0_36, %c0_37, %c0_38] : memref<1x64x32xf32, #tpu.memory_space<vmem>>, vector<1x64x32xf32>
      %63 = vector.shape_cast %62 : vector<1x64x32xf32> to vector<64x32xf32>
      %64 = vector.shape_cast %61 : vector<64x32xf32> to vector<1x64x32xf32>
      tpu.vector_store %arg6[%c0_36, %c0_37, %c0_38], %64 {strides = array<i32>} : memref<1x64x32xf32, #tpu.memory_space<vmem>>, vector<1x64x32xf32>,
    } else {
    }
    return
  }
  func.func @transform_0(%arg0: i32, %arg1: i32) -> (i32, i32, i32) {
    %c0_i32 = arith.constant 0 : i32
    %c0_i32_0 = arith.constant 0 : i32
    return %arg0, %c0_i32, %arg1 : i32, i32, i32
  }
  func.func @transform_1(%arg0: i32, %arg1: i32) -> (i32, i32) {
    %c0_i32 = arith.constant 0 : i32
    %c0_i32_0 = arith.constant 0 : i32
    %c0_i32_1 = arith.constant 0 : i32
    return %c0_i32, %c0_i32_0 : i32, i32
  }
  func.func @transform_2(%arg0: i32, %arg1: i32) -> (i32, i32) {
    %c0_i32 = arith.constant 0 : i32
    %c0_i32_0 = arith.constant 0 : i32
    %c0_i32_1 = arith.constant 0 : i32
    return %c0_i32, %c0_i32_0 : i32, i32
  }
  func.func @transform_3(%arg0: i32, %arg1: i32) -> (i32, i32) {
    %c0_i32 = arith.constant 0 : i32
    %c0_i32_0 = arith.constant 0 : i32
    %c0_i32_1 = arith.constant 0 : i32
    return %c0_i32, %c0_i32_0 : i32, i32
  }
  func.func @transform_4(%arg0: i32, %arg1: i32) -> (i32, i32, i32) {
    %c0_i32 = arith.constant 0 : i32
    %c0_i32_0 = arith.constant 0 : i32
    %c0_i32_1 = arith.constant 0 : i32
    return %arg0, %c0_i32, %c0_i32_0 : i32, i32, i32
  }
}

</mosaic_0001>

<llo_original>
// kernel: tpu_custom_call.1
$region0: #{tpu_custom_call.1}
  #allocation0 [shape = 'u32[]', space=smem, size = 0x4, offset = 0x4, fixed_abs, tag = 'smem constant byte address 0x4 - core index']
  #allocation1 [shape = 'u32[144,128]{1,0:T(1,128)}', space=vmem, size = 0x12000, scoped, tag = 'internal scratch']
  #allocation2 [shape = 'f32[1,64,32]{2,1,0:T(8,128)}', space=vmem, size = 0x8000, scoped, tag = 'scratch operand']
  #allocation3 [shape = 'f32[1,64,1]{2,1,0:T(8,128)}', space=vmem, size = 0x8000, scoped, tag = 'scratch operand']
  %s0 = inlined_call_operand.hbm [shape: f32[2,32,256], index: 0, kind: input, shape index: {}]
  %s1 = inlined_call_operand.hbm [shape: f32[64,32], index: 1, kind: input, shape index: {}]
  %s2 = inlined_call_operand.hbm [shape: f32[64,1], index: 2, kind: input, shape index: {}]
  %s3 = inlined_call_operand.hbm [shape: f32[64,1], index: 3, kind: input, shape index: {}]
  %s4 = inlined_call_operand.hbm [shape: f32[2,64,32], index: 4, kind: output, shape index: {}]
  %s5 = sld [smem:[#allocation0]]
  $region73: #{tpu_custom_call.1} parent=0
    _
  %s7 = ssub.s32 1, %s5
  %s8 = scalar_select 0, %s7, %s5
  $region1: #{tpu_custom_call.1} parent=0
    #allocation4 [shape = 'u8[65536]{0}', space=vmem, size = 0x10000, scoped, tag = 'input window, operand 0']
    #allocation5 [shape = 's32[2]{0}', space=sflag, size = 0x8, scoped, tag = 'scoped memory for tpu_custom_call.1']
    #allocation6 [shape = 's32[2]{0}', space=sflag, size = 0x8, scoped, tag = 'scoped memory for tpu_custom_call.1']
    #allocation7 [shape = 'u8[32768]{0}', space=vmem, size = 0x8000, scoped, tag = 'input window, operand 1, single buffered']
    #allocation8 [shape = 's32[1]{0}', space=sflag, size = 0x4, scoped, tag = 'scoped memory for tpu_custom_call.1']
    #allocation9 [shape = 'u8[32768]{0}', space=vmem, size = 0x8000, scoped, tag = 'input window, operand 2, single buffered']
    #allocation10 [shape = 'u8[32768]{0}', space=vmem, size = 0x8000, scoped, tag = 'input window, operand 3, single buffered']
    #allocation11 [shape = 's32[1]{0}', space=sflag, size = 0x4, scoped, tag = 'scoped memory for tpu_custom_call.1']
    #allocation12 [shape = 'u8[65536]{0}', space=vmem, size = 0x10000, scoped, tag = 'output window, operand 0']
    %9 = vsyncpa [#allocation5], 0
    %s10 = scalar_lea.sflag [#allocation5], 1
    %11 = vsyncpa %s10, 0
    %12 = vsyncpa [#allocation8], 0
    %13 = vsyncpa [#allocation11], 0
    %14 = vsyncpa [#allocation6], 0
    %s15 = scalar_lea.sflag [#allocation6], 1
    %16 = vsyncpa %s15, 0
    loop: start=0, step=1, limit=4
    $region2: #{tpu_custom_call.1} parent=1 // loop_pre_header
      _
    $region3: #{tpu_custom_call.1} parent=1 // loop_header
      %s18 = sphi 0, %s22
      %p19 = scmp.ge.s32.totalorder %s18, 4
      %s25 = sphi 0, %s37
      %s26 = sphi 0, %s33
      %s27 = sphi 0, %s25
      %s28 = sphi 0, %s26
      %s29 = sphi 0, %s27
      %s30 = sphi 0, %s28
      %s42 = sphi 0, %s44
      %s45 = sphi 0, %s42
      %s46 = sphi 0, %s45
      %s62 = sphi 0, %s46
      %s66 = sphi 0, %s66
      %s68 = sphi 0, %s66
      %s69 = sphi 0, %s68
      %s83 = sphi 0, %s69
      %s87 = sphi 0, %s87
      %s89 = sphi 0, %s87
      %s90 = sphi 0, %s89
      %s104 = sphi 0, %s90
      %s108 = sphi 0, %s108
      %s110 = sphi 0, %s108
      %s111 = sphi 0, %s110
      %s125 = sphi 0, %s111
      %s131 = sphi 0, %s133
      %s134 = sphi 0, %s131
      %s135 = sphi 0, %s134
      %s151 = sphi 0, %s135
    $region4: #{tpu_custom_call.1} parent=1 // loop_header_branch
      %21 = sbr.rel (%p19) target = $region8
    $region5: #{tpu_custom_call.1} parent=1 // loop_body
      %s23 = ssub.s32 %s18, 1
      %s24 = ssub.s32 %s18, 2
      %s31 = sadd.s32 1, %s26
      %p32 = scmp.ge.s32.totalorder %s31, 1
      %s33 = scalar_select %p32, 0, %s31
      %s34 = sadd.s32 1, %s25
      %s35 = scalar_select %p32, %s34, %s25
      %p36 = scmp.ge.s32.totalorder %s35, 2
      %s37 = scalar_select %p36, 0, %s35
      %s38 = ssub.s32 %s25, %s37
      %s39 = ssub.s32 %s26, %s33
      %s40 = sor.u32 %s38, %s39
      %p41 = scmp.eq.s32.totalorder %s40, 0
      %s43 = sadd.s32 %s42, 1
      %s44 = scalar_select %p41, %s42, %s43
      %p47 = pneg %p41
      %p48 = scmp.eq.s32.totalorder %s18, 1
      %p49 = por %p47, %p48
      %p50 = scmp.ne.s32.totalorder %s42, %s45
      %p51 = scmp.eq.s32.totalorder %s18, 0
      %p52 = por %p50, %p51
      %p53 = scmp.ne.s32.totalorder %s42, %s45
      %p54 = scmp.eq.s32.totalorder %s23, 1
      %p55 = por %p53, %p54
      %p56 = scmp.ne.s32.totalorder %s45, %s46
      %p57 = scmp.eq.s32.totalorder %s23, 0
      %p58 = por %p56, %p57
      %p59 = scmp.ne.s32.totalorder %s45, %s46
      %p60 = scmp.eq.s32.totalorder %s24, 1
      %p61 = por %p59, %p60
      %p63 = scmp.ne.s32.totalorder %s46, %s62
      %p64 = scmp.eq.s32.totalorder %s24, 0
      %p65 = por %p63, %p64
      %s67 = sadd.s32 %s66, 1
      %p70 = scmp.eq.s32.totalorder %s18, 1
      %p71 = scmp.ne.s32.totalorder %s66, %s68
      %p72 = scmp.eq.s32.totalorder %s18, 0
      %p73 = por %p71, %p72
      %p74 = scmp.ne.s32.totalorder %s66, %s68
      %p75 = scmp.eq.s32.totalorder %s23, 1
      %p76 = por %p74, %p75
      %p77 = scmp.ne.s32.totalorder %s68, %s69
      %p78 = scmp.eq.s32.totalorder %s23, 0
      %p79 = por %p77, %p78
      %p80 = scmp.ne.s32.totalorder %s68, %s69
      %p81 = scmp.eq.s32.totalorder %s24, 1
      %p82 = por %p80, %p81
      %p84 = scmp.ne.s32.totalorder %s69, %s83
      %p85 = scmp.eq.s32.totalorder %s24, 0
      %p86 = por %p84, %p85
      %s88 = sadd.s32 %s87, 1
      %p91 = scmp.eq.s32.totalorder %s18, 1
      %p92 = scmp.ne.s32.totalorder %s87, %s89
      %p93 = scmp.eq.s32.totalorder %s18, 0
      %p94 = por %p92, %p93
      %p95 = scmp.ne.s32.totalorder %s87, %s89
      %p96 = scmp.eq.s32.totalorder %s23, 1
      %p97 = por %p95, %p96
      %p98 = scmp.ne.s32.totalorder %s89, %s90
      %p99 = scmp.eq.s32.totalorder %s23, 0
      %p100 = por %p98, %p99
      %p101 = scmp.ne.s32.totalorder %s89, %s90
      %p102 = scmp.eq.s32.totalorder %s24, 1
      %p103 = por %p101, %p102
      %p105 = scmp.ne.s32.totalorder %s90, %s104
      %p106 = scmp.eq.s32.totalorder %s24, 0
      %p107 = por %p105, %p106
      %s109 = sadd.s32 %s108, 1
      %p112 = scmp.eq.s32.totalorder %s18, 1
      %p113 = scmp.ne.s32.totalorder %s108, %s110
      %p114 = scmp.eq.s32.totalorder %s18, 0
      %p115 = por %p113, %p114
      %p116 = scmp.ne.s32.totalorder %s108, %s110
      %p117 = scmp.eq.s32.totalorder %s23, 1
      %p118 = por %p116, %p117
      %p119 = scmp.ne.s32.totalorder %s110, %s111
      %p120 = scmp.eq.s32.totalorder %s23, 0
      %p121 = por %p119, %p120
      %p122 = scmp.ne.s32.totalorder %s110, %s111
      %p123 = scmp.eq.s32.totalorder %s24, 1
      %p124 = por %p122, %p123
      %p126 = scmp.ne.s32.totalorder %s111, %s125
      %p127 = scmp.eq.s32.totalorder %s24, 0
      %p128 = por %p126, %p127
      %s129 = ssub.s32 %s25, %s37
      %p130 = scmp.eq.s32.totalorder %s129, 0
      %s132 = sadd.s32 %s131, 1
      %s133 = scalar_select %p130, %s131, %s132
      %p136 = pneg %p130
      %p137 = scmp.eq.s32.totalorder %s18, 1
      %p138 = por %p136, %p137
      %p139 = scmp.ne.s32.totalorder %s131, %s134
      %p140 = scmp.eq.s32.totalorder %s18, 0
      %p141 = por %p139, %p140
      %p142 = scmp.ne.s32.totalorder %s131, %s134
      %p143 = scmp.eq.s32.totalorder %s23, 1
      %p144 = por %p142, %p143
      %p145 = scmp.ne.s32.totalorder %s134, %s135
      %p146 = scmp.eq.s32.totalorder %s23, 0
      %p147 = por %p145, %p146
      %p148 = scmp.ne.s32.totalorder %s134, %s135
      %p149 = scmp.eq.s32.totalorder %s24, 1
      %p150 = por %p148, %p149
      %p152 = scmp.ne.s32.totalorder %s135, %s151
      %p153 = scmp.eq.s32.totalorder %s24, 0
      %p154 = por %p152, %p153
      %p155 = scmp.le.s32.totalorder 1, %s18
      %p156 = scmp.lt.s32.totalorder %s18, 3
      %p157 = pnand %p155, %p156
      %p158 = pneg %p157
      // Predicated region
      $region9: #{tpu_custom_call.1} parent=5 // pred_check
        _
      $region10: #{tpu_custom_call.1} parent=5 // pred_check_branch
        %160 = sbr.rel (%p157) target = $region12
      $region11: #{tpu_custom_call.1} parent=5 // pred_region
        %s161 = ssub.s32 %s18, 1
        // Predicated region
        $region13: #{tpu_custom_call.1} parent=11 // pred_check
          %p162 = pneg %p79
        $region14: #{tpu_custom_call.1} parent=11 // pred_check_branch
          %164 = sbr.rel (%p162) target = $region16
        $region15: #{tpu_custom_call.1} parent=11 // pred_region
          %s166 = ssub.s32 1024, 1024
          %167 = vsyncadd [#allocation8], %s166
          %s168 = sshll.u32 [#allocation7], 4
          %s169 = int_to_ptr.vmem [resolvable:$true] %s168
          %174 = dma.hbm_to_vmem [thread:$0]  %s1, 1024, %s169, [#allocation8], 128, 128, 8
        $region16: #{tpu_custom_call.1} parent=11 // pred_fallthru
          _
        // Predicated region
        $region17: #{tpu_custom_call.1} parent=11 // pred_check
          %p175 = pneg %p100
        $region18: #{tpu_custom_call.1} parent=11 // pred_check_branch
          %177 = sbr.rel (%p175) target = $region20
        $region19: #{tpu_custom_call.1} parent=11 // pred_region
          %s179 = ssub.s32 1024, 1024
          %180 = vsyncadd [#allocation8], %s179
          %s181 = sshll.u32 [#allocation9], 4
          %s182 = int_to_ptr.vmem [resolvable:$true] %s181
          %187 = dma.hbm_to_vmem [thread:$0]  %s2, 1024, %s182, [#allocation8], 128, 128, 8
        $region20: #{tpu_custom_call.1} parent=11 // pred_fallthru
          _
        // Predicated region
        $region21: #{tpu_custom_call.1} parent=11 // pred_check
          %p188 = pneg %p121
        $region22: #{tpu_custom_call.1} parent=11 // pred_check_branch
          %190 = sbr.rel (%p188) target = $region24
        $region23: #{tpu_custom_call.1} parent=11 // pred_region
          %s192 = ssub.s32 1024, 1024
          %193 = vsyncadd [#allocation11], %s192
          %s194 = sshll.u32 [#allocation10], 4
          %s195 = int_to_ptr.vmem [resolvable:$true] %s194
          %200 = dma.hbm_to_vmem [thread:$0]  %s3, 1024, %s195, [#allocation11], 128, 128, 8
        $region24: #{tpu_custom_call.1} parent=11 // pred_fallthru
          _
      $region12: #{tpu_custom_call.1} parent=5 // pred_fallthru
        _
      %p201 = scmp.lt.s32.totalorder %s18, 2
      // Predicated region
      $region25: #{tpu_custom_call.1} parent=5 // pred_check
        %p202 = pneg %p201
      $region26: #{tpu_custom_call.1} parent=5 // pred_check_branch
        %204 = sbr.rel (%p202) target = $region28
      $region27: #{tpu_custom_call.1} parent=5 // pred_region
        // Predicated region
        $region29: #{tpu_custom_call.1} parent=27 // pred_check
          %p205 = pneg %p52
        $region30: #{tpu_custom_call.1} parent=27 // pred_check_branch
          %207 = sbr.rel (%p205) target = $region32
        $region31: #{tpu_custom_call.1} parent=27 // pred_region
          %s208 = sand.u32 %s42, 1
          %s209 = scalar_lea.sflag [#allocation5], %s208
          %s210 = sand.u32 %s42, 1
          %s211 = smul.addr %s210, 64
          %s212 = scalar_lea.vmem [#allocation4], %s211
          %s213 = smul.u32 2, %s26
          %s215 = ssub.s32 1024, 1024
          %216 = vsyncadd %s209, %s215
          %s217 = smul.addr %s25, 8
          %s218 = sadd.s32 %s213, %s217
          %s219 = smul.addr %s218, 128
          %s220 = scalar_lea.hbm %s0, %s219
          %s221 = sshll.u32 %s212, 4
          %s222 = int_to_ptr.vmem [resolvable:$true] %s221
          %227 = dma.hbm_to_vmem [thread:$0]  %s220, 1024, %s222, %s209, 256, 256, 16
        $region32: #{tpu_custom_call.1} parent=27 // pred_fallthru
          _
      $region28: #{tpu_custom_call.1} parent=5 // pred_fallthru
        _
      %p228 = scmp.le.s32.totalorder 1, %s18
      %p229 = scmp.lt.s32.totalorder %s18, 3
      %p230 = pnand %p228, %p229
      %p231 = pneg %p230
      // Predicated region
      $region33: #{tpu_custom_call.1} parent=5 // pred_check
        _
      $region34: #{tpu_custom_call.1} parent=5 // pred_check_branch
        %233 = sbr.rel (%p230) target = $region36
      $region35: #{tpu_custom_call.1} parent=5 // pred_region
        %s234 = ssub.s32 %s18, 1
        %s235 = sand.u32 %s45, 1
        %s236 = scalar_lea.sflag [#allocation5], %s235
        %s237 = sand.u32 %s45, 1
        %s238 = smul.addr %s237, 64
        %s239 = scalar_lea.vmem [#allocation4], %s238
        // Predicated region
        $region37: #{tpu_custom_call.1} parent=35 // pred_check
          %p240 = pneg %p58
        $region38: #{tpu_custom_call.1} parent=35 // pred_check_branch
          %242 = sbr.rel (%p240) target = $region40
        $region39: #{tpu_custom_call.1} parent=35 // pred_region
          %243 = dma.done %s236, 1024
        $region40: #{tpu_custom_call.1} parent=35 // pred_fallthru
          _
        // Predicated region
        $region41: #{tpu_custom_call.1} parent=35 // pred_check
          %p244 = pneg %p79
        $region42: #{tpu_custom_call.1} parent=35 // pred_check_branch
          %246 = sbr.rel (%p244) target = $region44
        $region43: #{tpu_custom_call.1} parent=35 // pred_region
          %247 = dma.done [#allocation8], 1024
        $region44: #{tpu_custom_call.1} parent=35 // pred_fallthru
          _
        // Predicated region
        $region45: #{tpu_custom_call.1} parent=35 // pred_check
          %p248 = pneg %p100
        $region46: #{tpu_custom_call.1} parent=35 // pred_check_branch
          %250 = sbr.rel (%p248) target = $region48
        $region47: #{tpu_custom_call.1} parent=35 // pred_region
          %251 = dma.done [#allocation8], 1024
        $region48: #{tpu_custom_call.1} parent=35 // pred_fallthru
          _
        // Predicated region
        $region49: #{tpu_custom_call.1} parent=35 // pred_check
          %p252 = pneg %p121
        $region50: #{tpu_custom_call.1} parent=35 // pred_check_branch
          %254 = sbr.rel (%p252) target = $region52
        $region51: #{tpu_custom_call.1} parent=35 // pred_region
          %255 = dma.done [#allocation11], 1024
        $region52: #{tpu_custom_call.1} parent=35 // pred_fallthru
          _
        %s256 = sand.u32 %s45, 1
        %s257 = scalar_lea.sflag [#allocation5], %s256
        %s258 = sand.u32 %s45, 1
        %s259 = smul.addr %s258, 64
        %s260 = scalar_lea.vmem [#allocation4], %s259
        %p261 = pneg %p58
        %p262 = pneg %p55
        %p263 = pneg %p79
        %p264 = pneg %p76
        %p265 = pneg %p100
        %p266 = pneg %p97
        %p267 = pneg %p121
        %p268 = pneg %p118
        %p269 = pneg %p147
        %p270 = pneg %p144
        %s271 = sand.u32 %s134, 1
        %s272 = scalar_lea.sflag [#allocation6], %s271
        %s273 = sand.u32 %s134, 1
        %s274 = smul.addr %s273, 64
        %s275 = scalar_lea.vmem [#allocation12], %s274
        %s276 = smul.u32 2, %s28
        %p278 = scmp.eq.s32.totalorder %s28, 0
        // Predicated region
        $region53: #{tpu_custom_call.1} parent=35 // pred_check
          %p279 = pneg %p278
        $region54: #{tpu_custom_call.1} parent=35 // pred_check_branch
          %281 = sbr.rel (%p279) target = $region56
        $region55: #{tpu_custom_call.1} parent=35 // pred_region
          %vm282 = vcmask 261120
          %283 = vst.msk [vmem:[#allocation2] sm:$0xff] %vm282, 0.0
          %284 = vst.msk [vmem:[#allocation2 + $0x8] sm:$0xff] %vm282, 0.0
          %285 = vst.msk [vmem:[#allocation2 + $0x10] sm:$0xff] %vm282, 0.0
          %286 = vst.msk [vmem:[#allocation2 + $0x18] sm:$0xff] %vm282, 0.0
          %287 = vst.msk [vmem:[#allocation2 + $0x20] sm:$0xff] %vm282, 0.0
          %288 = vst.msk [vmem:[#allocation2 + $0x28] sm:$0xff] %vm282, 0.0
          %289 = vst.msk [vmem:[#allocation2 + $0x30] sm:$0xff] %vm282, 0.0
          %290 = vst.msk [vmem:[#allocation2 + $0x38] sm:$0xff] %vm282, 0.0
          %vm291 = vcmask 7168
          %292 = vst.msk [vmem:[#allocation3] sm:$0xff] %vm291, 0.0
          %293 = vst.msk [vmem:[#allocation3 + $0x8] sm:$0xff] %vm291, 0.0
          %294 = vst.msk [vmem:[#allocation3 + $0x10] sm:$0xff] %vm291, 0.0
          %295 = vst.msk [vmem:[#allocation3 + $0x18] sm:$0xff] %vm291, 0.0
          %296 = vst.msk [vmem:[#allocation3 + $0x20] sm:$0xff] %vm291, 0.0
          %297 = vst.msk [vmem:[#allocation3 + $0x28] sm:$0xff] %vm291, 0.0
          %298 = vst.msk [vmem:[#allocation3 + $0x30] sm:$0xff] %vm291, 0.0
          %299 = vst.msk [vmem:[#allocation3 + $0x38] sm:$0xff] %vm291, 0.0
        $region56: #{tpu_custom_call.1} parent=35 // pred_fallthru
          _
        %v300 = vld [vmem:[#allocation7] sm:$0xff]
        %v301 = vld [vmem:[#allocation7 + $0x8] sm:$0xff]
        %v302 = vld [vmem:[#allocation7 + $0x10] sm:$0xff]
        %v303 = vld [vmem:[#allocation7 + $0x18] sm:$0xff]
        %v304 = vld [vmem:[#allocation7 + $0x20] sm:$0xff]
        %v305 = vld [vmem:[#allocation7 + $0x28] sm:$0xff]
        %v306 = vld [vmem:[#allocation7 + $0x30] sm:$0xff]
        %v307 = vld [vmem:[#allocation7 + $0x38] sm:$0xff]
        %v308 = vpack.c.bf16 %v301, %v300
        %v309 = vpack.c.bf16 %v303, %v302
        %v310 = vpack.c.bf16 %v305, %v304
        %v311 = vpack.c.bf16 %v307, %v306
        %v312 = vld [vmem:[#allocation9] sm:$0xff]
        %v313 = vld [vmem:[#allocation9 + $0x8] sm:$0xff]
        %v314 = vld [vmem:[#allocation9 + $0x10] sm:$0xff]
        %v315 = vld [vmem:[#allocation9 + $0x18] sm:$0xff]
        %v316 = vld [vmem:[#allocation9 + $0x20] sm:$0xff]
        %v317 = vld [vmem:[#allocation9 + $0x28] sm:$0xff]
        %v318 = vld [vmem:[#allocation9 + $0x30] sm:$0xff]
        %v319 = vld [vmem:[#allocation9 + $0x38] sm:$0xff]
        %v320 = vld [vmem:[#allocation10] sm:$0xff]
        %v321 = vld [vmem:[#allocation10 + $0x8] sm:$0xff]
        %v322 = vld [vmem:[#allocation10 + $0x10] sm:$0xff]
        %v323 = vld [vmem:[#allocation10 + $0x18] sm:$0xff]
        %v324 = vld [vmem:[#allocation10 + $0x20] sm:$0xff]
        %v325 = vld [vmem:[#allocation10 + $0x28] sm:$0xff]
        %v326 = vld [vmem:[#allocation10 + $0x30] sm:$0xff]
        %v327 = vld [vmem:[#allocation10 + $0x38] sm:$0xff]
        %v328 = vld [vmem:[%s239] sm:$0xff]
        %v329 = vld [vmem:[%s239 + $0x8] sm:$0xff]
        %v330 = vld [vmem:[%s239 + $0x10] sm:$0xff]
        %v331 = vld [vmem:[%s239 + $0x18] sm:$0xff]
        %v332 = vld [vmem:[%s239 + $0x20] sm:$0xff]
        %v333 = vld [vmem:[%s239 + $0x28] sm:$0xff]
        %v334 = vld [vmem:[%s239 + $0x30] sm:$0xff]
        %v335 = vld [vmem:[%s239 + $0x38] sm:$0xff]
        %v336 = vpack.c.bf16 %v330, %v328
        %v337 = vpack.c.bf16 %v331, %v329
        %v338 = vpack.c.bf16 %v334, %v332
        %v339 = vpack.c.bf16 %v335, %v333
        %v340 = vmul.f32 %v328, %v328
        %v341 = vmul.f32 %v329, %v329
        %v342 = vmul.f32 %v330, %v330
        %v343 = vmul.f32 %v331, %v331
        %v344 = vmul.f32 %v332, %v332
        %v345 = vmul.f32 %v333, %v333
        %v346 = vmul.f32 %v334, %v334
        %v347 = vmul.f32 %v335, %v335
        %v348 = vadd.f32 %v340, %v342
        %v349 = vadd.f32 %v348, %v344
        %v350 = vadd.f32 %v349, %v346
        %v351 = vrot.slane %v350, 4
        %v352 = vadd.f32 %v350, %v351
        %v353 = vrot.slane %v352, 2
        %v354 = vadd.f32 %v352, %v353
        %v355 = vrot.slane %v354, 1
        %v356 = vadd.f32 %v354, %v355
        %v357 = vadd.f32 %v341, %v343
        %v358 = vadd.f32 %v357, %v345
        %v359 = vadd.f32 %v358, %v347
        %v360 = vrot.slane %v359, 4
        %v361 = vadd.f32 %v359, %v360
        %v362 = vrot.slane %v361, 2
        %v363 = vadd.f32 %v361, %v362
        %v364 = vrot.slane %v363, 1
        %v365 = vadd.f32 %v363, %v364
        %vm366 = vcmask 261120
        %v368 = vsel %vm366, %v308, 0
        %v371 = vsel %vm366, %v309, 0
        %v374 = vsel %vm366, %v310, 0
        %v377 = vsel %vm366, %v311, 0
        %379 = vmatprep.subr.bf16.mxu0 %v337
        %380 = vmatpush1.bf16.msra.mxu0 %v336
        %381 = vmatprep.subr.bf16.mxu0 %v339
        %382 = vmatpush1.bf16.msra.mxu0 %v338
        %383 = vmatprep.subr.bf16.mxu0 0
        %384 = vmatpush1.bf16.msra.mxu0 0
        %385 = vmatprep.subr.bf16.mxu0 0
        %386 = vmatpush1.bf16.msra.mxu0 0
        %387 = vmatprep.subr.bf16.mxu0 0
        %388 = vmatpush1.bf16.msra.mxu0 0
        %389 = vmatprep.subr.bf16.mxu0 0
        %390 = vmatpush1.bf16.msra.mxu0 0
        %391 = vmatprep.subr.bf16.mxu0 0
        %392 = vmatpush1.bf16.msra.mxu0 0
        %393 = vmatprep.subr.bf16.mxu0 0
        %394 = vmatpush1.bf16.msra.mxu0 0
        %395 = vmatprep.subr.bf16.mxu0 0
        %396 = vmatpush1.bf16.msra.mxu0 0
        %397 = vmatprep.subr.bf16.mxu0 0
        %398 = vmatpush1.bf16.msra.mxu0 0
        %399 = vmatprep.subr.bf16.mxu0 0
        %400 = vmatpush1.bf16.msra.mxu0 0
        %401 = vmatprep.subr.bf16.mxu0 0
        %402 = vmatpush1.bf16.msra.mxu0 0
        %403 = vmatprep.subr.bf16.mxu0 0
        %404 = vmatpush1.bf16.msra.mxu0 0
        %405 = vmatprep.subr.bf16.mxu0 0
        %406 = vmatpush1.bf16.msra.mxu0 0
        %407 = vmatprep.subr.bf16.mxu0 0
        %408 = vmatpush1.bf16.msra.mxu0 0
        %409 = vmatprep.subr.bf16.mxu0 0
        %410 = vmatpush1.bf16.msra.mxu0 0
        %411 = vmatprep.mubr.bf16.mxu0 0
        %412 = vmatmul.mubr.bf16.gmra.mrb[0].mxu0 %v368
        %v413 = vpop.f32.mrb[0].mxu0
        %v414 = vadd.f32 0.0, %v413
        %v415 = vpop.f32.mrb[0].mxu0
        %v416 = vadd.f32 0.0, %v415
        %v417 = vpop.f32.mrb[0].mxu0
        %v418 = vadd.f32 0.0, %v417
        %v419 = vpop.f32.mrb[0].mxu0
        %v420 = vadd.f32 0.0, %v419
        %421 = vmatprep.mubr.bf16.mxu0 0
        %422 = vmatmul.mubr.bf16.gmra.mrb[0].mxu0 %v371
        %v423 = vpop.f32.mrb[0].mxu0
        %v424 = vadd.f32 0.0, %v423
        %v425 = vpop.f32.mrb[0].mxu0
        %v426 = vadd.f32 0.0, %v425
        %v427 = vpop.f32.mrb[0].mxu0
        %v428 = vadd.f32 0.0, %v427
        %v429 = vpop.f32.mrb[0].mxu0
        %v430 = vadd.f32 0.0, %v429
        %431 = vmatprep.mubr.bf16.mxu0 0
        %432 = vmatmul.mubr.bf16.gmra.mrb[0].mxu0 %v374
        %v433 = vpop.f32.mrb[0].mxu0
        %v434 = vadd.f32 0.0, %v433
        %v435 = vpop.f32.mrb[0].mxu0
        %v436 = vadd.f32 0.0, %v435
        %v437 = vpop.f32.mrb[0].mxu0
        %v438 = vadd.f32 0.0, %v437
        %v439 = vpop.f32.mrb[0].mxu0
        %v440 = vadd.f32 0.0, %v439
        %441 = vmatprep.mubr.bf16.mxu0 0
        %442 = vmatmul.mubr.bf16.gmra.mrb[0].mxu0 %v377
        %v443 = vpop.f32.mrb[0].mxu0
        %v444 = vadd.f32 0.0, %v443
        %v445 = vpop.f32.mrb[0].mxu0
        %v446 = vadd.f32 0.0, %v445
        %v447 = vpop.f32.mrb[0].mxu0
        %v448 = vadd.f32 0.0, %v447
        %v449 = vpop.f32.mrb[0].mxu0
        %v450 = vadd.f32 0.0, %v449
        %451 = vdwg.mxu0
        %453 = vset.pattern.permute.xlu0 0
        %454 = vperm.xlu0 %453, %v320
        %v455 = vpop.permute.xlu0 %454
        %458 = vset.pattern.permute.xlu0 0
        %459 = vperm.xlu0 %458, %v321
        %v460 = vpop.permute.xlu0 %459
        %463 = vset.pattern.permute.xlu0 0
        %464 = vperm.xlu0 %463, %v322
        %v465 = vpop.permute.xlu0 %464
        %468 = vset.pattern.permute.xlu0 0
        %469 = vperm.xlu0 %468, %v323
        %v470 = vpop.permute.xlu0 %469
        %473 = vset.pattern.permute.xlu0 0
        %474 = vperm.xlu0 %473, %v324
        %v475 = vpop.permute.xlu0 %474
        %478 = vset.pattern.permute.xlu0 0
        %479 = vperm.xlu0 %478, %v325
        %v480 = vpop.permute.xlu0 %479
        %483 = vset.pattern.permute.xlu0 0
        %484 = vperm.xlu0 %483, %v326
        %v485 = vpop.permute.xlu0 %484
        %488 = vset.pattern.permute.xlu0 0
        %489 = vperm.xlu0 %488, %v327
        %v490 = vpop.permute.xlu0 %489
        %v492 = vadd.f32 %v356, %v455
        %v493 = vadd.f32 %v365, %v455
        %v494 = vadd.f32 %v356, %v460
        %v495 = vadd.f32 %v365, %v460
        %v496 = vadd.f32 %v356, %v465
        %v497 = vadd.f32 %v365, %v465
        %v498 = vadd.f32 %v356, %v470
        %v499 = vadd.f32 %v365, %v470
        %v500 = vadd.f32 %v356, %v475
        %v501 = vadd.f32 %v365, %v475
        %v502 = vadd.f32 %v356, %v480
        %v503 = vadd.f32 %v365, %v480
        %v504 = vadd.f32 %v356, %v485
        %v505 = vadd.f32 %v365, %v485
        %v506 = vadd.f32 %v356, %v490
        %v507 = vadd.f32 %v365, %v490
        %v508 = vmul.f32 %v414, 2.0
        %v509 = vmul.f32 %v416, 2.0
        %v510 = vmul.f32 %v418, 2.0
        %v511 = vmul.f32 %v420, 2.0
        %v512 = vmul.f32 %v424, 2.0
        %v513 = vmul.f32 %v426, 2.0
        %v514 = vmul.f32 %v428, 2.0
        %v515 = vmul.f32 %v430, 2.0
        %v516 = vmul.f32 %v434, 2.0
        %v517 = vmul.f32 %v436, 2.0
        %v518 = vmul.f32 %v438, 2.0
        %v519 = vmul.f32 %v440, 2.0
        %v520 = vmul.f32 %v444, 2.0
        %v521 = vmul.f32 %v446, 2.0
        %v522 = vmul.f32 %v448, 2.0
        %v523 = vmul.f32 %v450, 2.0
        %v524 = vsub.f32 %v492, %v508
        %v525 = vsub.f32 %v493, %v509
        %v526 = vsub.f32 %v494, %v510
        %v527 = vsub.f32 %v495, %v511
        %v528 = vsub.f32 %v496, %v512
        %v529 = vsub.f32 %v497, %v513
        %v530 = vsub.f32 %v498, %v514
        %v531 = vsub.f32 %v499, %v515
        %v532 = vsub.f32 %v500, %v516
        %v533 = vsub.f32 %v501, %v517
        %v534 = vsub.f32 %v502, %v518
        %v535 = vsub.f32 %v503, %v519
        %v536 = vsub.f32 %v504, %v520
        %v537 = vsub.f32 %v505, %v521
        %v538 = vsub.f32 %v506, %v522
        %v539 = vsub.f32 %v507, %v523
        %541 = vset.pattern.permute.xlu0 0
        %542 = vperm.xlu0 %541, %v312
        %v543 = vpop.permute.xlu0 %542
        %546 = vset.pattern.permute.xlu0 0
        %547 = vperm.xlu0 %546, %v313
        %v548 = vpop.permute.xlu0 %547
        %551 = vset.pattern.permute.xlu0 0
        %552 = vperm.xlu0 %551, %v314
        %v553 = vpop.permute.xlu0 %552
        %556 = vset.pattern.permute.xlu0 0
        %557 = vperm.xlu0 %556, %v315
        %v558 = vpop.permute.xlu0 %557
        %561 = vset.pattern.permute.xlu0 0
        %562 = vperm.xlu0 %561, %v316
        %v563 = vpop.permute.xlu0 %562
        %566 = vset.pattern.permute.xlu0 0
        %567 = vperm.xlu0 %566, %v317
        %v568 = vpop.permute.xlu0 %567
        %571 = vset.pattern.permute.xlu0 0
        %572 = vperm.xlu0 %571, %v318
        %v573 = vpop.permute.xlu0 %572
        %576 = vset.pattern.permute.xlu0 0
        %577 = vperm.xlu0 %576, %v319
        %v578 = vpop.permute.xlu0 %577
        %v580 = vmul.f32 %v543, %v524
        %v581 = vmul.f32 %v543, %v525
        %v582 = vmul.f32 %v548, %v526
        %v583 = vmul.f32 %v548, %v527
        %v584 = vmul.f32 %v553, %v528
        %v585 = vmul.f32 %v553, %v529
        %v586 = vmul.f32 %v558, %v530
        %v587 = vmul.f32 %v558, %v531
        %v588 = vmul.f32 %v563, %v532
        %v589 = vmul.f32 %v563, %v533
        %v590 = vmul.f32 %v568, %v534
        %v591 = vmul.f32 %v568, %v535
        %v592 = vmul.f32 %v573, %v536
        %v593 = vmul.f32 %v573, %v537
        %v594 = vmul.f32 %v578, %v538
        %v595 = vmul.f32 %v578, %v539
        %v596 = vmax.f32 %v580, %v584
        %v597 = vmax.f32 %v582, %v586
        %v598 = vmax.f32 %v596, %v588
        %v599 = vmax.f32 %v597, %v590
        %v600 = vmax.f32 %v598, %v592
        %v601 = vmax.f32 %v599, %v594
        %v602 = vmax.f32 %v600, %v601
        %v603 = vrot.slane %v602, 4
        %v604 = vmax.f32 %v602, %v603
        %v605 = vrot.slane %v604, 2
        %v606 = vmax.f32 %v604, %v605
        %v607 = vrot.slane %v606, 1
        %v608 = vmax.f32 %v606, %v607
        %v609 = vmax.f32 %v581, %v585
        %v610 = vmax.f32 %v583, %v587
        %v611 = vmax.f32 %v609, %v589
        %v612 = vmax.f32 %v610, %v591
        %v613 = vmax.f32 %v611, %v593
        %v614 = vmax.f32 %v612, %v595
        %v615 = vmax.f32 %v613, %v614
        %v616 = vrot.slane %v615, 4
        %v617 = vmax.f32 %v615, %v616
        %v618 = vrot.slane %v617, 2
        %v619 = vmax.f32 %v617, %v618
        %v620 = vrot.slane %v619, 1
        %v621 = vmax.f32 %v619, %v620
        %v622 = vsub.f32 %v580, %v608
        %v623 = vsub.f32 %v581, %v621
        %v624 = vsub.f32 %v582, %v608
        %v625 = vsub.f32 %v583, %v621
        %v626 = vsub.f32 %v584, %v608
        %v627 = vsub.f32 %v585, %v621
        %v628 = vsub.f32 %v586, %v608
        %v629 = vsub.f32 %v587, %v621
        %v630 = vsub.f32 %v588, %v608
        %v631 = vsub.f32 %v589, %v621
        %v632 = vsub.f32 %v590, %v608
        %v633 = vsub.f32 %v591, %v621
        %v634 = vsub.f32 %v592, %v608
        %v635 = vsub.f32 %v593, %v621
        %v636 = vsub.f32 %v594, %v608
        %v637 = vsub.f32 %v595, %v621
        %v638 = vmul.f32 %v622, 1.442695
        %v639 = vpow.pop %v638
        %v640 = vmul.f32 %v623, 1.442695
        %v641 = vpow.pop %v640
        %v642 = vmul.f32 %v624, 1.442695
        %v643 = vpow.pop %v642
        %v644 = vmul.f32 %v625, 1.442695
        %v645 = vpow.pop %v644
        %v646 = vmul.f32 %v626, 1.442695
        %v647 = vpow.pop %v646
        %v648 = vmul.f32 %v627, 1.442695
        %v649 = vpow.pop %v648
        %v650 = vmul.f32 %v628, 1.442695
        %v651 = vpow.pop %v650
        %v652 = vmul.f32 %v629, 1.442695
        %v653 = vpow.pop %v652
        %v654 = vmul.f32 %v630, 1.442695
        %v655 = vpow.pop %v654
        %v656 = vmul.f32 %v631, 1.442695
        %v657 = vpow.pop %v656
        %v658 = vmul.f32 %v632, 1.442695
        %v659 = vpow.pop %v658
        %v660 = vmul.f32 %v633, 1.442695
        %v661 = vpow.pop %v660
        %v662 = vmul.f32 %v634, 1.442695
        %v663 = vpow.pop %v662
        %v664 = vmul.f32 %v635, 1.442695
        %v665 = vpow.pop %v664
        %v666 = vmul.f32 %v636, 1.442695
        %v667 = vpow.pop %v666
        %v668 = vmul.f32 %v637, 1.442695
        %v669 = vpow.pop %v668
        %v670 = vadd.f32 %v639, %v643
        %v671 = vadd.f32 %v670, %v647
        %v672 = vadd.f32 %v671, %v651
        %v673 = vadd.f32 %v672, %v655
        %v674 = vadd.f32 %v673, %v659
        %v675 = vadd.f32 %v674, %v663
        %v676 = vadd.f32 %v675, %v667
        %v677 = vrot.slane %v676, 4
        %v678 = vadd.f32 %v676, %v677
        %v679 = vrot.slane %v678, 2
        %v680 = vadd.f32 %v678, %v679
        %v681 = vrot.slane %v680, 1
        %v682 = vadd.f32 %v680, %v681
        %v683 = vadd.f32 %v641, %v645
        %v684 = vadd.f32 %v683, %v649
        %v685 = vadd.f32 %v684, %v653
        %v686 = vadd.f32 %v685, %v657
        %v687 = vadd.f32 %v686, %v661
        %v688 = vadd.f32 %v687, %v665
        %v689 = vadd.f32 %v688, %v669
        %v690 = vrot.slane %v689, 4
        %v691 = vadd.f32 %v689, %v690
        %v692 = vrot.slane %v691, 2
        %v693 = vadd.f32 %v691, %v692
        %v694 = vrot.slane %v693, 1
        %v695 = vadd.f32 %v693, %v694
        %v696 = vrcp.pop %v682
        %v697 = vrcp.pop %v695
        %v698 = vmul.f32 %v682, %v696
        %v699 = vmul.f32 %v695, %v697
        %v700 = vsub.f32 2.0, %v698
        %v701 = vsub.f32 2.0, %v699
        %v702 = vmul.f32 %v696, %v700
        %v703 = vmul.f32 %v697, %v701
        %v704 = vmul.f32 %v639, %v702
        %v705 = vmul.f32 %v641, %v703
        %v706 = vmul.f32 %v643, %v702
        %v707 = vmul.f32 %v645, %v703
        %v708 = vmul.f32 %v647, %v702
        %v709 = vmul.f32 %v649, %v703
        %v710 = vmul.f32 %v651, %v702
        %v711 = vmul.f32 %v653, %v703
        %v712 = vmul.f32 %v655, %v702
        %v713 = vmul.f32 %v657, %v703
        %v714 = vmul.f32 %v659, %v702
        %v715 = vmul.f32 %v661, %v703
        %v716 = vmul.f32 %v663, %v702
        %v717 = vmul.f32 %v665, %v703
        %v718 = vmul.f32 %v667, %v702
        %v719 = vmul.f32 %v669, %v703
        %v720 = vpack.c.bf16 %v706, %v704
        %v721 = vpack.c.bf16 %v707, %v705
        %v722 = vpack.c.bf16 %v710, %v708
        %v723 = vpack.c.bf16 %v711, %v709
        %v724 = vpack.c.bf16 %v714, %v712
        %v725 = vpack.c.bf16 %v715, %v713
        %v726 = vpack.c.bf16 %v718, %v716
        %v727 = vpack.c.bf16 %v719, %v717
        %728 = vmatprep.subr.bf16.mxu0 %v337
        %729 = vmatpush1.bf16.xpose.msra.mxu0 %v336
        %730 = vmatprep.subr.bf16.mxu0 %v339
        %731 = vmatpush1.bf16.xpose.msra.mxu0 %v338
        %732 = vmatprep.subr.bf16.mxu0 0
        %733 = vmatpush1.bf16.xpose.msra.mxu0 0
        %734 = vmatprep.subr.bf16.mxu0 0
        %735 = vmatpush1.bf16.xpose.msra.mxu0 0
        %736 = vmatprep.subr.bf16.mxu0 0
        %737 = vmatpush1.bf16.xpose.msra.mxu0 0
        %738 = vmatprep.subr.bf16.mxu0 0
        %739 = vmatpush1.bf16.xpose.msra.mxu0 0
        %740 = vmatprep.subr.bf16.mxu0 0
        %741 = vmatpush1.bf16.xpose.msra.mxu0 0
        %742 = vmatprep.subr.bf16.mxu0 0
        %743 = vmatpush1.bf16.xpose.msra.mxu0 0
        %744 = vmatprep.subr.bf16.mxu0 0
        %745 = vmatpush1.bf16.xpose.msra.mxu0 0
        %746 = vmatprep.subr.bf16.mxu0 0
        %747 = vmatpush1.bf16.xpose.msra.mxu0 0
        %748 = vmatprep.subr.bf16.mxu0 0
        %749 = vmatpush1.bf16.xpose.msra.mxu0 0
        %750 = vmatprep.subr.bf16.mxu0 0
        %751 = vmatpush1.bf16.xpose.msra.mxu0 0
        %752 = vmatprep.subr.bf16.mxu0 0
        %753 = vmatpush1.bf16.xpose.msra.mxu0 0
        %754 = vmatprep.subr.bf16.mxu0 0
        %755 = vmatpush1.bf16.xpose.msra.mxu0 0
        %756 = vmatprep.subr.bf16.mxu0 0
        %757 = vmatpush1.bf16.xpose.msra.mxu0 0
        %758 = vmatprep.subr.bf16.mxu0 0
        %759 = vmatpush1.bf16.xpose.msra.mxu0 0
        %760 = vmatprep.mubr.bf16.mxu0 %v721
        %761 = vmatmul.mubr.bf16.gmra.mrb[0].mxu0 %v720
        %v762 = vpop.f32.mrb[0].mxu0
        %v763 = vadd.f32 0.0, %v762
        %v764 = vpop.f32.mrb[0].mxu0
        %v765 = vpop.f32.mrb[0].mxu0
        %v766 = vadd.f32 0.0, %v765
        %v767 = vpop.f32.mrb[0].mxu0
        %768 = vmatprep.mubr.bf16.mxu0 %v723
        %769 = vmatmul.mubr.bf16.gmra.mrb[0].mxu0 %v722
        %v770 = vpop.f32.mrb[0].mxu0
        %v771 = vadd.f32 0.0, %v770
        %v772 = vpop.f32.mrb[0].mxu0
        %v773 = vpop.f32.mrb[0].mxu0
        %v774 = vadd.f32 0.0, %v773
        %v775 = vpop.f32.mrb[0].mxu0
        %776 = vmatprep.mubr.bf16.mxu0 %v725
        %777 = vmatmul.mubr.bf16.gmra.mrb[0].mxu0 %v724
        %v778 = vpop.f32.mrb[0].mxu0
        %v779 = vadd.f32 0.0, %v778
        %v780 = vpop.f32.mrb[0].mxu0
        %v781 = vpop.f32.mrb[0].mxu0
        %v782 = vadd.f32 0.0, %v781
        %v783 = vpop.f32.mrb[0].mxu0
        %784 = vmatprep.mubr.bf16.mxu0 %v727
        %785 = vmatmul.mubr.bf16.gmra.mrb[0].mxu0 %v726
        %v786 = vpop.f32.mrb[0].mxu0
        %v787 = vadd.f32 0.0, %v786
        %v788 = vpop.f32.mrb[0].mxu0
        %v789 = vpop.f32.mrb[0].mxu0
        %v790 = vadd.f32 0.0, %v789
        %v791 = vpop.f32.mrb[0].mxu0
        %792 = vdwg.mxu0
        %v793 = vadd.f32 %v704, %v705
        %794 = vadd.xlane.f32.xlu0 %v793
        %v795 = vpop.xlane.xlu0 %794
        %v796 = vadd.f32 %v706, %v707
        %797 = vadd.xlane.f32.xlu0 %v796
        %v798 = vpop.xlane.xlu0 %797
        %v799 = vadd.f32 %v708, %v709
        %800 = vadd.xlane.f32.xlu0 %v799
        %v801 = vpop.xlane.xlu0 %800
        %v802 = vadd.f32 %v710, %v711
        %803 = vadd.xlane.f32.xlu0 %v802
        %v804 = vpop.xlane.xlu0 %803
        %v805 = vadd.f32 %v712, %v713
        %806 = vadd.xlane.f32.xlu0 %v805
        %v807 = vpop.xlane.xlu0 %806
        %v808 = vadd.f32 %v714, %v715
        %809 = vadd.xlane.f32.xlu0 %v808
        %v810 = vpop.xlane.xlu0 %809
        %v811 = vadd.f32 %v716, %v717
        %812 = vadd.xlane.f32.xlu0 %v811
        %v813 = vpop.xlane.xlu0 %812
        %v814 = vadd.f32 %v718, %v719
        %815 = vadd.xlane.f32.xlu0 %v814
        %v816 = vpop.xlane.xlu0 %815
        %v817 = vld [vmem:[#allocation2] sm:$0xff]
        %v818 = vld [vmem:[#allocation2 + $0x8] sm:$0xff]
        %v819 = vld [vmem:[#allocation2 + $0x10] sm:$0xff]
        %v820 = vld [vmem:[#allocation2 + $0x18] sm:$0xff]
        %v821 = vld [vmem:[#allocation2 + $0x20] sm:$0xff]
        %v822 = vld [vmem:[#allocation2 + $0x28] sm:$0xff]
        %v823 = vld [vmem:[#allocation2 + $0x30] sm:$0xff]
        %v824 = vld [vmem:[#allocation2 + $0x38] sm:$0xff]
        %v825 = vadd.f32 %v817, %v763
        %v826 = vadd.f32 %v818, %v766
        %v827 = vadd.f32 %v819, %v771
        %v828 = vadd.f32 %v820, %v774
        %v829 = vadd.f32 %v821, %v779
        %v830 = vadd.f32 %v822, %v782
        %v831 = vadd.f32 %v823, %v787
        %v832 = vadd.f32 %v824, %v790
        %833 = vst.msk [vmem:[#allocation2] sm:$0xff] %vm366, %v825
        %834 = vst.msk [vmem:[#allocation2 + $0x8] sm:$0xff] %vm366, %v826
        %835 = vst.msk [vmem:[#allocation2 + $0x10] sm:$0xff] %vm366, %v827
        %836 = vst.msk [vmem:[#allocation2 + $0x18] sm:$0xff] %vm366, %v828
        %837 = vst.msk [vmem:[#allocation2 + $0x20] sm:$0xff] %vm366, %v829
        %838 = vst.msk [vmem:[#allocation2 + $0x28] sm:$0xff] %vm366, %v830
        %839 = vst.msk [vmem:[#allocation2 + $0x30] sm:$0xff] %vm366, %v831
        %840 = vst.msk [vmem:[#allocation2 + $0x38] sm:$0xff] %vm366, %v832
        %v841 = vld [vmem:[#allocation3] sm:$0xff]
        %v842 = vld [vmem:[#allocation3 + $0x8] sm:$0xff]
        %v843 = vld [vmem:[#allocation3 + $0x10] sm:$0xff]
        %v844 = vld [vmem:[#allocation3 + $0x18] sm:$0xff]
        %v845 = vld [vmem:[#allocation3 + $0x20] sm:$0xff]
        %v846 = vld [vmem:[#allocation3 + $0x28] sm:$0xff]
        %v847 = vld [vmem:[#allocation3 + $0x30] sm:$0xff]
        %v848 = vld [vmem:[#allocation3 + $0x38] sm:$0xff]
        %v849 = vadd.f32 %v841, %v795
        %v850 = vadd.f32 %v842, %v798
        %v851 = vadd.f32 %v843, %v801
        %v852 = vadd.f32 %v844, %v804
        %v853 = vadd.f32 %v845, %v807
        %v854 = vadd.f32 %v846, %v810
        %v855 = vadd.f32 %v847, %v813
        %v856 = vadd.f32 %v848, %v816
        %vm857 = vcmask 7168
        %858 = vst.msk [vmem:[#allocation3] sm:$0xff] %vm857, %v849
        %859 = vst.msk [vmem:[#allocation3 + $0x8] sm:$0xff] %vm857, %v850
        %860 = vst.msk [vmem:[#allocation3 + $0x10] sm:$0xff] %vm857, %v851
        %861 = vst.msk [vmem:[#allocation3 + $0x18] sm:$0xff] %vm857, %v852
        %862 = vst.msk [vmem:[#allocation3 + $0x20] sm:$0xff] %vm857, %v853
        %863 = vst.msk [vmem:[#allocation3 + $0x28] sm:$0xff] %vm857, %v854
        %864 = vst.msk [vmem:[#allocation3 + $0x30] sm:$0xff] %vm857, %v855
        %865 = vst.msk [vmem:[#allocation3 + $0x38] sm:$0xff] %vm857, %v856
        // Predicated region
        $region57: #{tpu_custom_call.1} parent=35 // pred_check
          %p866 = pneg %p278
        $region58: #{tpu_custom_call.1} parent=35 // pred_check_branch
          %868 = sbr.rel (%p866) target = $region60
        $region59: #{tpu_custom_call.1} parent=35 // pred_region
          %v869 = vld [vmem:[#allocation2] sm:$0xff]
          %v870 = vld [vmem:[#allocation2 + $0x8] sm:$0xff]
          %v871 = vld [vmem:[#allocation2 + $0x10] sm:$0xff]
          %v872 = vld [vmem:[#allocation2 + $0x18] sm:$0xff]
          %v873 = vld [vmem:[#allocation2 + $0x20] sm:$0xff]
          %v874 = vld [vmem:[#allocation2 + $0x28] sm:$0xff]
          %v875 = vld [vmem:[#allocation2 + $0x30] sm:$0xff]
          %v876 = vld [vmem:[#allocation2 + $0x38] sm:$0xff]
          %v877 = vld [vmem:[#allocation3] sm:$0xff]
          %v878 = vld [vmem:[#allocation3 + $0x8] sm:$0xff]
          %v879 = vld [vmem:[#allocation3 + $0x10] sm:$0xff]
          %v880 = vld [vmem:[#allocation3 + $0x18] sm:$0xff]
          %v881 = vld [vmem:[#allocation3 + $0x20] sm:$0xff]
          %v882 = vld [vmem:[#allocation3 + $0x28] sm:$0xff]
          %v883 = vld [vmem:[#allocation3 + $0x30] sm:$0xff]
          %v884 = vld [vmem:[#allocation3 + $0x38] sm:$0xff]
          %886 = vset.pattern.permute.xlu0 0
          %887 = vperm.xlu0 %886, %v877
          %v888 = vpop.permute.xlu0 %887
          %891 = vset.pattern.permute.xlu0 0
          %892 = vperm.xlu0 %891, %v878
          %v893 = vpop.permute.xlu0 %892
          %896 = vset.pattern.permute.xlu0 0
          %897 = vperm.xlu0 %896, %v879
          %v898 = vpop.permute.xlu0 %897
          %901 = vset.pattern.permute.xlu0 0
          %902 = vperm.xlu0 %901, %v880
          %v903 = vpop.permute.xlu0 %902
          %906 = vset.pattern.permute.xlu0 0
          %907 = vperm.xlu0 %906, %v881
          %v908 = vpop.permute.xlu0 %907
          %911 = vset.pattern.permute.xlu0 0
          %912 = vperm.xlu0 %911, %v882
          %v913 = vpop.permute.xlu0 %912
          %916 = vset.pattern.permute.xlu0 0
          %917 = vperm.xlu0 %916, %v883
          %v918 = vpop.permute.xlu0 %917
          %921 = vset.pattern.permute.xlu0 0
          %922 = vperm.xlu0 %921, %v884
          %v923 = vpop.permute.xlu0 %922
          %v925 = vmul.f32 %v300, %v888
          %v926 = vmul.f32 %v301, %v893
          %v927 = vmul.f32 %v302, %v898
          %v928 = vmul.f32 %v303, %v903
          %v929 = vmul.f32 %v304, %v908
          %v930 = vmul.f32 %v305, %v913
          %v931 = vmul.f32 %v306, %v918
          %v932 = vmul.f32 %v307, %v923
          %v933 = vsub.f32 %v869, %v925
          %v934 = vsub.f32 %v870, %v926
          %v935 = vsub.f32 %v871, %v927
          %v936 = vsub.f32 %v872, %v928
          %v937 = vsub.f32 %v873, %v929
          %v938 = vsub.f32 %v874, %v930
          %v939 = vsub.f32 %v875, %v931
          %v940 = vsub.f32 %v876, %v932
          %941 = vst.msk [vmem:[%s275] sm:$0xff] %vm366, %v933
          %942 = vst.msk [vmem:[%s275 + $0x8] sm:$0xff] %vm366, %v934
          %943 = vst.msk [vmem:[%s275 + $0x10] sm:$0xff] %vm366, %v935
          %944 = vst.msk [vmem:[%s275 + $0x18] sm:$0xff] %vm366, %v936
          %945 = vst.msk [vmem:[%s275 + $0x20] sm:$0xff] %vm366, %v937
          %946 = vst.msk [vmem:[%s275 + $0x28] sm:$0xff] %vm366, %v938
          %947 = vst.msk [vmem:[%s275 + $0x30] sm:$0xff] %vm366, %v939
          %948 = vst.msk [vmem:[%s275 + $0x38] sm:$0xff] %vm366, %v940
        $region60: #{tpu_custom_call.1} parent=35 // pred_fallthru
          _
        %s949 = sand.u32 %s134, 1
        %s950 = scalar_lea.sflag [#allocation6], %s949
        %s951 = sand.u32 %s134, 1
        %s952 = smul.addr %s951, 64
        %s953 = scalar_lea.vmem [#allocation12], %s952
        // Predicated region
        $region61: #{tpu_custom_call.1} parent=35 // pred_check
          %p954 = pneg %p144
        $region62: #{tpu_custom_call.1} parent=35 // pred_check_branch
          %956 = sbr.rel (%p954) target = $region64
        $region63: #{tpu_custom_call.1} parent=35 // pred_region
          %s958 = ssub.s32 1024, 1024
          %959 = vsyncadd %s950, %s958
          %s960 = smul.addr %s27, 8
          %s961 = smul.addr %s960, 128
          %s962 = scalar_lea.hbm %s4, %s961
          %s963 = sshll.u32 %s953, 4
          %s964 = int_to_ptr.vmem [resolvable:$true] %s963
          %969 = dma.vmem_to_hbm [thread:$0]  %s964, 1024, %s962, %s950, 128, 128, 8
        $region64: #{tpu_custom_call.1} parent=35 // pred_fallthru
          _
      $region36: #{tpu_custom_call.1} parent=5 // pred_fallthru
        _
      %p970 = scmp.le.s32.totalorder 2, %s18
      // Predicated region
      $region65: #{tpu_custom_call.1} parent=5 // pred_check
        %p971 = pneg %p970
      $region66: #{tpu_custom_call.1} parent=5 // pred_check_branch
        %973 = sbr.rel (%p971) target = $region68
      $region67: #{tpu_custom_call.1} parent=5 // pred_region
        %s974 = ssub.s32 %s18, 2
        // Predicated region
        $region69: #{tpu_custom_call.1} parent=67 // pred_check
          %p975 = pneg %p150
        $region70: #{tpu_custom_call.1} parent=67 // pred_check_branch
          %977 = sbr.rel (%p975) target = $region72
        $region71: #{tpu_custom_call.1} parent=67 // pred_region
          %s978 = sand.u32 %s135, 1
          %s979 = scalar_lea.sflag [#allocation6], %s978
          %s980 = sand.u32 %s135, 1
          %s981 = smul.addr %s980, 64
          %s982 = scalar_lea.vmem [#allocation12], %s981
          %983 = dma.done %s979, 1024
        $region72: #{tpu_custom_call.1} parent=67 // pred_fallthru
          _
      $region68: #{tpu_custom_call.1} parent=5 // pred_fallthru
        _
    $region6: #{tpu_custom_call.1} parent=1 // loop_footer
      %s22 = sadd.s32 1, %s18
    $region7: #{tpu_custom_call.1} parent=1 // loop_footer_branch
      %17 = sbr.rel target = $region3
    $region8: #{tpu_custom_call.1} parent=1 // loop_exit
      _
    %984 = vsyncpa [#allocation5], 1
    %s985 = scalar_lea.sflag [#allocation5], 1
    %986 = vsyncpa %s985, 1
    %987 = vsyncpa [#allocation8], 1
    %988 = vsyncpa [#allocation11], 1
    %989 = vsyncpa [#allocation6], 1
    %s990 = scalar_lea.sflag [#allocation6], 1
    %991 = vsyncpa %s990, 1

</llo_original>
